<compile_context>
chip_gen: v7x
topology: tpu7x:2x2x1
jax: 0.10.0
libtpu: 0.0.40
codegen_flags: <defaults>
</compile_context>

<pallas_src>
import functools

import jax
import jax.numpy as jnp
from jax.experimental import pallas as pl
from jax.experimental.pallas import tpu as pltpu


# --------------------------------------------------------------------------- #
# Device feature detection (perf-only; any misdetection is harmless for
# correctness).
# --------------------------------------------------------------------------- #
@functools.lru_cache(maxsize=1)
def _tpu_features():
    """Returns (num_tensorcores_to_split_grid_over, bf16_vector_units_ok)."""
    kind = ""
    try:
        kind = (jax.devices()[0].device_kind or "").lower()
    except Exception:
        pass
    # Two TensorCores per chip: v7x; megacore fusion: v4 / v5p.
    two_cores = ("v7" in kind) or ("v4" in kind) or ("v5p" in kind)
    # bf16-capable VPU / EUP: v6 and v7 families (NOT v5e).
    bf16_ok = ("v6" in kind) or ("v7" in kind)
    return (2 if two_cores else 1), bf16_ok


def _pick_tile_blocks(n_blocks, req_blocks, num_cores):
    """Pick the row tile in units of 128 lanes.

    Single-TC chips: just the largest requested tile that covers N.
    Dual-TC chips : largest tile whose grid length is EVEN, so the "parallel"
    axis splits evenly across the two TensorCores.
    """
    req_blocks = max(1, min(req_blocks, n_blocks))
    if num_cores < 2 or n_blocks < 2:
        return req_blocks
    for b in range(req_blocks, 0, -1):
        grid = -(-n_blocks // b)
        if grid % 2 == 0:
            return b
    return req_blocks


# --------------------------------------------------------------------------- #
# Kernel
# --------------------------------------------------------------------------- #
def _make_trunk_kernel(num_layers, compute_dtype):
    """Fused feature-major MLP kernel for `num_layers` Linear layers.

    Kernel args: t_ref, w0..w{L-1}, b0..b{L-1}, o_ref
      t_ref : (1, TM)          query points, batch on lanes (f32)
      w_l   : (out_l, in_l)    PyTorch Linear layout, in compute_dtype
      b_l   : (out_l, 1)       f32
      o_ref : (K, TM)          f32
    """

    def kernel(t_ref, *refs):
        w_refs = refs[:num_layers]
        b_refs = refs[num_layers:2 * num_layers]
        o_ref = refs[2 * num_layers]

        # Layer 0: in_features == 1 -> broadcasted scale + bias on the VPU:
        # (H0, 1) * (1, TM) + (H0, 1) -> (H0, TM).  No degenerate MXU matmul,
        # and every lane of the vreg carries a real query point.
        z = w_refs[0][...] * t_ref[...] + b_refs[0][...]
        if num_layers > 1:
            # tanh runs on the EUP; bf16 on v6e/v7x doubles its throughput.
            z = jnp.tanh(z.astype(compute_dtype))

        for l in range(1, num_layers):
            # (out, in) @ (in, TM) -> (out, TM): MXU output lanes carry the
            # batch tile, f32 accumulation regardless of compute_dtype.
            z = jnp.dot(w_refs[l][...], z,
                        preferred_element_type=jnp.float32) + b_refs[l][...]
            if l < num_layers - 1:          # no activation on the last layer
                z = jnp.tanh(z.astype(compute_dtype))

        o_ref[...] = z.astype(o_ref.dtype)

    return kernel


# --------------------------------------------------------------------------- #
# Wrapper
# --------------------------------------------------------------------------- #
def trunk_forward(t, weights, biases, *, tile_m=2048, feature_major=False,
                  compute_dtype=None):
    """Pallas forward pass of the trunk MLP.

    t              : (N, 1) float32 query points
    weights        : list of (out_l, in_l) float32 arrays (PyTorch layout)
    biases         : list of (out_l,) float32 arrays
    feature_major  : True  -> return (K, N) feature-major (recommended; no
                              transpose, lane-dense for downstream consumers)
                     False -> return (N, K) matching the PyTorch module
    compute_dtype  : None -> auto (bf16 on v6e/v7x, f32 on v5e)
    """
    num_layers = len(weights)
    assert num_layers >= 1
    assert weights[0].shape[1] == 1, "trunk expects scalar query points (N, 1)"
    N = t.shape[0]
    K = weights[-1].shape[0]

    num_cores, bf16_ok = _tpu_features()
    if compute_dtype is None:
        compute_dtype = jnp.bfloat16 if bf16_ok else jnp.float32

    # --- row tile / grid ----------------------------------------------------
    n_blocks = pl.cdiv(N, 128)                       # 128-lane blocks covering N
    blk = _pick_tile_blocks(n_blocks, max(1, tile_m // 128), num_cores)
    tile = blk * 128
    grid_m = pl.cdiv(N, tile)                        # partial last block is masked

    # --- feature-major operands (no explicit padding) -------------------------
    t_fm = t.reshape(1, N).astype(jnp.float32)       # (N,1)->(1,N): free relayout
    w_fm = [w.astype(compute_dtype) for w in weights]
    b_fm = [b.reshape(-1, 1).astype(jnp.float32) for b in biases]

    in_specs = [pl.BlockSpec((1, tile), lambda i: (0, i))]
    # Weights / biases: whole-array blocks with constant index_map -> resident
    # in VMEM across the grid.
    for w in w_fm:
        in_specs.append(pl.BlockSpec(w.shape, lambda i: (0, 0)))
    for b in b_fm:
        in_specs.append(pl.BlockSpec(b.shape, lambda i: (0, 0)))
    out_specs = pl.BlockSpec((K, tile), lambda i: (0, i))

    # --- advisory cost estimate ------------------------------------------------
    flops = 0
    transcendentals = 0
    for l, w in enumerate(weights):
        out_f, in_f = w.shape
        flops += 2 * N * out_f * in_f + N * out_f
        if l < num_layers - 1:
            transcendentals += N * out_f
    bytes_accessed = (4 * N + 4 * K * N
                      + sum(4 * int(w.size) for w in weights)
                      + sum(4 * int(b.size) for b in biases))
    cost = pl.CostEstimate(flops=flops,
                           transcendentals=transcendentals,
                           bytes_accessed=bytes_accessed)

    out_fm = pl.pallas_call(
        _make_trunk_kernel(num_layers, compute_dtype),
        grid=(grid_m,),
        in_specs=in_specs,
        out_specs=out_specs,
        out_shape=jax.ShapeDtypeStruct((K, N), jnp.float32),
        compiler_params=pltpu.CompilerParams(
            dimension_semantics=("parallel",)),
        cost_estimate=cost,
    )(t_fm, *w_fm, *b_fm)

    if feature_major:
        return out_fm                      # (K, N): hot path, no transpose
    # Compatibility path only: matches the PyTorch module's (N, K) output but
    # pays one extra XLA transpose over the (small) result.
    return out_fm.T


# --------------------------------------------------------------------------- #
# Parameter init / plain-JAX reference
# --------------------------------------------------------------------------- #
def init_trunk_params(key, layer_sizes, K):
    """Xavier-normal weights / zero biases, matching torch.nn.init.xavier_normal_
    + zeros_ in trunk.__init__.  Weights kept in PyTorch (out, in) layout."""
    dims = [1] + list(layer_sizes) + [K]
    weights, biases = [], []
    for i in range(1, len(dims)):
        fan_in, fan_out = dims[i - 1], dims[i]
        key, sub = jax.random.split(key)
        std = jnp.sqrt(2.0 / (fan_in + fan_out))
        w = std * jax.random.normal(sub, (fan_out, fan_in), dtype=jnp.float32)
        b = jnp.zeros((fan_out,), dtype=jnp.float32)
        weights.append(w)
        biases.append(b)
    return weights, biases


def trunk_reference(t, weights, biases):
    """Plain-JAX reference mirroring the PyTorch forward (z @ W^T + b)."""
    z = t
    for w, b in zip(weights[:-1], biases[:-1]):
        z = jnp.tanh(z @ w.T + b)
    return z @ weights[-1].T + biases[-1]


if __name__ == "__main__":
    # Module config: trunk(layer_sizes=[32, 32], K=8, activation=torch.tanh)
    layer_sizes = [32, 32]
    K = 8

    key = jax.random.PRNGKey(0)
    pkey, tkey = jax.random.split(key)
    weights, biases = init_trunk_params(pkey, layer_sizes, K)

    _, bf16_ok = _tpu_features()
    # f32 MXU accumulation everywhere; tolerance loosened only when the
    # bf16-activation path (v6e/v7x) is active.
    tol = 5e-2 if bf16_ok else 1e-4

    # 1) Hot path: feature-major (K, N) output, no wrapper transpose.
    N = 256
    t = jax.random.normal(tkey, (N, 1), dtype=jnp.float32)
    out_fm = jax.block_until_ready(
        trunk_forward(t, weights, biases, feature_major=True))
    ref = trunk_reference(t, weights, biases)
    assert out_fm.shape == (K, N)
    assert jnp.allclose(out_fm.T, ref, atol=tol, rtol=tol), "mismatch (feature-major)"

    # 2) PyTorch-convention path, with N not a multiple of 128 to exercise the
    #    masked partial last block (no explicit padding anywhere).
    N2 = 200
    t2 = jax.random.normal(jax.random.PRNGKey(1), (N2, 1), dtype=jnp.float32)
    out2 = jax.block_until_ready(trunk_forward(t2, weights, biases))
    ref2 = trunk_reference(t2, weights, biases)
    assert out2.shape == (N2, K)
    assert jnp.allclose(out2, ref2, atol=tol, rtol=tol), "mismatch (partial block)"

    print("KERNEL_OK")
</pallas_src>

<mosaic_0001>
module attributes {stable_mosaic.version = 11 : i64} {
  func.func @kernel(%arg0: i32, %arg1: memref<1x256xf32, #tpu.memory_space<vmem>>, %arg2: memref<32x1xf32, #tpu.memory_space<vmem>>, %arg3: memref<32x32xf32, #tpu.memory_space<vmem>>, %arg4: memref<8x32xf32, #tpu.memory_space<vmem>>, %arg5: memref<32x1xf32, #tpu.memory_space<vmem>>, %arg6: memref<32x1xf32, #tpu.memory_space<vmem>>, %arg7: memref<8x1xf32, #tpu.memory_space<vmem>>, %arg8: memref<8x256xf32, #tpu.memory_space<vmem>>) attributes {dimension_semantics = [#tpu.dimension_semantics<parallel>], iteration_bounds = array<i64: 1>, scalar_prefetch = 0 : i64, scratch_operands = 0 : i64, tpu.core_type = #tpu.core_type<tc>, window_params = [{transform_indices = @transform_0, window_bounds = array<i64: 1, 256>}, {pipeline_mode = #tpu.pipeline_mode<synchronous>, transform_indices = @transform_1, window_bounds = array<i64: 32, 1>}, {pipeline_mode = #tpu.pipeline_mode<synchronous>, transform_indices = @transform_2, window_bounds = array<i64: 32, 32>}, {pipeline_mode = #tpu.pipeline_mode<synchronous>, transform_indices = @transform_3, window_bounds = array<i64: 8, 32>}, {pipeline_mode = #tpu.pipeline_mode<synchronous>, transform_indices = @transform_4, window_bounds = array<i64: 32, 1>}, {pipeline_mode = #tpu.pipeline_mode<synchronous>, transform_indices = @transform_5, window_bounds = array<i64: 32, 1>}, {pipeline_mode = #tpu.pipeline_mode<synchronous>, transform_indices = @transform_6, window_bounds = array<i64: 8, 1>}, {transform_indices = @transform_7, window_bounds = array<i64: 8, 256>}]} {
    %c0 = arith.constant 0 : index
    %c0_0 = arith.constant 0 : index
    %0 = vector.load %arg2[%c0, %c0_0] : memref<32x1xf32, #tpu.memory_space<vmem>>, vector<32x1xf32>
    %c0_1 = arith.constant 0 : index
    %c0_2 = arith.constant 0 : index
    %1 = vector.load %arg1[%c0_1, %c0_2] : memref<1x256xf32, #tpu.memory_space<vmem>>, vector<1x256xf32>
    %2 = vector.broadcast %0 : vector<32x1xf32> to vector<32x256xf32>
    %3 = vector.broadcast %1 : vector<1x256xf32> to vector<32x256xf32>
    %4 = arith.mulf %2, %3 : vector<32x256xf32>
    %c0_3 = arith.constant 0 : index
    %c0_4 = arith.constant 0 : index
    %5 = vector.load %arg5[%c0_3, %c0_4] : memref<32x1xf32, #tpu.memory_space<vmem>>, vector<32x1xf32>
    %6 = vector.broadcast %5 : vector<32x1xf32> to vector<32x256xf32>
    %7 = arith.addf %4, %6 : vector<32x256xf32>
    %8 = math.tanh %7 : vector<32x256xf32>
    %c0_5 = arith.constant 0 : index
    %c0_6 = arith.constant 0 : index
    %9 = vector.load %arg3[%c0_5, %c0_6] : memref<32x32xf32, #tpu.memory_space<vmem>>, vector<32x32xf32>
    %cst = arith.constant dense<0.000000e+00> : vector<32x256xf32>
    %10 = tpu.matmul %9, %8, %cst {dimension_numbers = #tpu.dot_dimension_numbers<[1], [0], [0], [1], [0, 0, 1, 1], [], []>} : vector<32x32xf32>, vector<32x256xf32>, vector<32x256xf32> -> vector<32x256xf32>
    %c0_7 = arith.constant 0 : index
    %c0_8 = arith.constant 0 : index
    %11 = vector.load %arg6[%c0_7, %c0_8] : memref<32x1xf32, #tpu.memory_space<vmem>>, vector<32x1xf32>
    %12 = vector.broadcast %11 : vector<32x1xf32> to vector<32x256xf32>
    %13 = arith.addf %10, %12 : vector<32x256xf32>
    %14 = math.tanh %13 : vector<32x256xf32>
    %c0_9 = arith.constant 0 : index
    %c0_10 = arith.constant 0 : index
    %15 = vector.load %arg4[%c0_9, %c0_10] : memref<8x32xf32, #tpu.memory_space<vmem>>, vector<8x32xf32>
    %cst_11 = arith.constant dense<0.000000e+00> : vector<8x256xf32>
    %16 = tpu.matmul %15, %14, %cst_11 {dimension_numbers = #tpu.dot_dimension_numbers<[1], [0], [0], [1], [0, 0, 1, 1], [], []>} : vector<8x32xf32>, vector<32x256xf32>, vector<8x256xf32> -> vector<8x256xf32>
    %c0_12 = arith.constant 0 : index
    %c0_13 = arith.constant 0 : index
    %17 = vector.load %arg7[%c0_12, %c0_13] : memref<8x1xf32, #tpu.memory_space<vmem>>, vector<8x1xf32>
    %18 = vector.broadcast %17 : vector<8x1xf32> to vector<8x256xf32>
    %19 = arith.addf %16, %18 : vector<8x256xf32>
    %c0_14 = arith.constant 0 : index
    %c0_15 = arith.constant 0 : index
    %20 = vector.load %arg8[%c0_14, %c0_15] : memref<8x256xf32, #tpu.memory_space<vmem>>, vector<8x256xf32>
    tpu.vector_store %arg8[%c0_14, %c0_15], %19 {strides = array<i32>} : memref<8x256xf32, #tpu.memory_space<vmem>>, vector<8x256xf32>,
    return
  }
  func.func @transform_0(%arg0: i32) -> (i32, i32) {
    %c0_i32 = arith.constant 0 : i32
    %c0_i32_0 = arith.constant 0 : i32
    return %c0_i32, %arg0 : i32, i32
  }
  func.func @transform_1(%arg0: i32) -> (i32, i32) {
    %c0_i32 = arith.constant 0 : i32
    %c0_i32_0 = arith.constant 0 : i32
    %c0_i32_1 = arith.constant 0 : i32
    return %c0_i32, %c0_i32_0 : i32, i32
  }
  func.func @transform_2(%arg0: i32) -> (i32, i32) {
    %c0_i32 = arith.constant 0 : i32
    %c0_i32_0 = arith.constant 0 : i32
    %c0_i32_1 = arith.constant 0 : i32
    return %c0_i32, %c0_i32_0 : i32, i32
  }
  func.func @transform_3(%arg0: i32) -> (i32, i32) {
    %c0_i32 = arith.constant 0 : i32
    %c0_i32_0 = arith.constant 0 : i32
    %c0_i32_1 = arith.constant 0 : i32
    return %c0_i32, %c0_i32_0 : i32, i32
  }
  func.func @transform_4(%arg0: i32) -> (i32, i32) {
    %c0_i32 = arith.constant 0 : i32
    %c0_i32_0 = arith.constant 0 : i32
    %c0_i32_1 = arith.constant 0 : i32
    return %c0_i32, %c0_i32_0 : i32, i32
  }
  func.func @transform_5(%arg0: i32) -> (i32, i32) {
    %c0_i32 = arith.constant 0 : i32
    %c0_i32_0 = arith.constant 0 : i32
    %c0_i32_1 = arith.constant 0 : i32
    return %c0_i32, %c0_i32_0 : i32, i32
  }
  func.func @transform_6(%arg0: i32) -> (i32, i32) {
    %c0_i32 = arith.constant 0 : i32
    %c0_i32_0 = arith.constant 0 : i32
    %c0_i32_1 = arith.constant 0 : i32
    return %c0_i32, %c0_i32_0 : i32, i32
  }
  func.func @transform_7(%arg0: i32) -> (i32, i32) {
    %c0_i32 = arith.constant 0 : i32
    %c0_i32_0 = arith.constant 0 : i32
    return %c0_i32, %arg0 : i32, i32
  }
}

</mosaic_0001>

<llo_original>
// kernel: tpu_custom_call.1
$region0: #{tpu_custom_call.1}
  #allocation0 [shape = 'u32[]', space=smem, size = 0x4, offset = 0x4, fixed_abs, tag = 'smem constant byte address 0x4 - core index']
  #allocation1 [shape = 'u32[144,128]{1,0:T(1,128)}', space=vmem, size = 0x12000, scoped, tag = 'internal scratch']
  %s0 = inlined_call_operand.vmem [shape: f32[1,256], index: 0, kind: input, shape index: {}]
  %s1 = inlined_call_operand.vmem [shape: f32[32,1], index: 1, kind: input, shape index: {}]
  %s2 = inlined_call_operand.vmem [shape: f32[32,32], index: 2, kind: input, shape index: {}]
  %s3 = inlined_call_operand.vmem [shape: f32[8,32], index: 3, kind: input, shape index: {}]
  %s4 = inlined_call_operand.vmem [shape: f32[32,1], index: 4, kind: input, shape index: {}]
  %s5 = inlined_call_operand.vmem [shape: f32[32,1], index: 5, kind: input, shape index: {}]
  %s6 = inlined_call_operand.vmem [shape: f32[8,1], index: 6, kind: input, shape index: {}]
  %s7 = inlined_call_operand.hbm [shape: f32[8,256], index: 7, kind: output, shape index: {}]
  %s8 = sld [smem:[#allocation0]]
  $region38: #{tpu_custom_call.1} parent=0
    _
  %s10 = ssub.s32 1, %s8
  %s11 = scalar_select 0, %s10, %s8
  $region1: #{tpu_custom_call.1} parent=0
    #allocation2 [shape = 'u8[8192]{0}', space=vmem, size = 0x2000, scoped, tag = 'output window, operand 0, single buffered']
    #allocation3 [shape = 's32[1]{0}', space=sflag, size = 0x4, scoped, tag = 'scoped memory for tpu_custom_call.1']
    %12 = vsyncpa [#allocation3], 0
    // Predicated region
    $region2: #{tpu_custom_call.1} parent=1 // pred_check
      _
    $region3: #{tpu_custom_call.1} parent=1 // pred_check_branch
      %14 = sbr.rel (0) target = $region5
    $region4: #{tpu_custom_call.1} parent=1 // pred_region
      _
    $region5: #{tpu_custom_call.1} parent=1 // pred_fallthru
      _
    // Predicated region
    $region6: #{tpu_custom_call.1} parent=1 // pred_check
      _
    $region7: #{tpu_custom_call.1} parent=1 // pred_check_branch
      %16 = sbr.rel (0) target = $region9
    $region8: #{tpu_custom_call.1} parent=1 // pred_region
      _
    $region9: #{tpu_custom_call.1} parent=1 // pred_fallthru
      _
    // Predicated region
    $region10: #{tpu_custom_call.1} parent=1 // pred_check
      _
    $region11: #{tpu_custom_call.1} parent=1 // pred_check_branch
      %18 = sbr.rel (0) target = $region13
    $region12: #{tpu_custom_call.1} parent=1 // pred_region
      _
    $region13: #{tpu_custom_call.1} parent=1 // pred_fallthru
      _
    // Predicated region
    $region14: #{tpu_custom_call.1} parent=1 // pred_check
      _
    $region15: #{tpu_custom_call.1} parent=1 // pred_check_branch
      %20 = sbr.rel (0) target = $region17
    $region16: #{tpu_custom_call.1} parent=1 // pred_region
      _
    $region17: #{tpu_custom_call.1} parent=1 // pred_fallthru
      _
    // Predicated region
    $region18: #{tpu_custom_call.1} parent=1 // pred_check
      _
    $region19: #{tpu_custom_call.1} parent=1 // pred_check_branch
      %22 = sbr.rel (0) target = $region21
    $region20: #{tpu_custom_call.1} parent=1 // pred_region
      _
    $region21: #{tpu_custom_call.1} parent=1 // pred_fallthru
      _
    // Predicated region
    $region22: #{tpu_custom_call.1} parent=1 // pred_check
      _
    $region23: #{tpu_custom_call.1} parent=1 // pred_check_branch
      %24 = sbr.rel (0) target = $region25
    $region24: #{tpu_custom_call.1} parent=1 // pred_region
      _
    $region25: #{tpu_custom_call.1} parent=1 // pred_fallthru
      _
    // Predicated region
    $region26: #{tpu_custom_call.1} parent=1 // pred_check
      _
    $region27: #{tpu_custom_call.1} parent=1 // pred_check_branch
      %26 = sbr.rel (0) target = $region29
    $region28: #{tpu_custom_call.1} parent=1 // pred_region
      _
    $region29: #{tpu_custom_call.1} parent=1 // pred_fallthru
      _
    %v27 = vld [vmem:[%s1] sm:$0xff]
    %v28 = vld [vmem:[%s1 + $0x8] sm:$0xff]
    %v29 = vld [vmem:[%s1 + $0x10] sm:$0xff]
    %v30 = vld [vmem:[%s1 + $0x18] sm:$0xff]
    %v31 = vld [vmem:[%s0] sm:$0x3]
    %33 = vset.pattern.permute.xlu0 0
    %34 = vperm.xlu0 %33, %v27
    %v35 = vpop.permute.xlu0 %34
    %38 = vset.pattern.permute.xlu0 0
    %39 = vperm.xlu0 %38, %v28
    %v40 = vpop.permute.xlu0 %39
    %43 = vset.pattern.permute.xlu0 0
    %44 = vperm.xlu0 %43, %v29
    %v45 = vpop.permute.xlu0 %44
    %48 = vset.pattern.permute.xlu0 0
    %49 = vperm.xlu0 %48, %v30
    %v50 = vpop.permute.xlu0 %49
    %v53 = vlaneseq
    %v54 = vshrl.u32 %v53, 7
    %v55 = vsub.s32 0, %v54
    %v56 = vrot.slane %v31, %v55
    %v57 = vlaneseq
    %v58 = vshrl.u32 %v57, 7
    %v59 = vsub.s32 1, %v58
    %v60 = vrot.slane %v31, %v59
    %v63 = vmul.f32 %v35, %v56
    %v64 = vmul.f32 %v35, %v60
    %v65 = vmul.f32 %v40, %v56
    %v66 = vmul.f32 %v40, %v60
    %v67 = vmul.f32 %v45, %v56
    %v68 = vmul.f32 %v45, %v60
    %v69 = vmul.f32 %v50, %v56
    %v70 = vmul.f32 %v50, %v60
    %v71 = vld [vmem:[%s4] sm:$0xff]
    %v72 = vld [vmem:[%s4 + $0x8] sm:$0xff]
    %v73 = vld [vmem:[%s4 + $0x10] sm:$0xff]
    %v74 = vld [vmem:[%s4 + $0x18] sm:$0xff]
    %76 = vset.pattern.permute.xlu0 0
    %77 = vperm.xlu0 %76, %v71
    %v78 = vpop.permute.xlu0 %77
    %81 = vset.pattern.permute.xlu0 0
    %82 = vperm.xlu0 %81, %v72
    %v83 = vpop.permute.xlu0 %82
    %86 = vset.pattern.permute.xlu0 0
    %87 = vperm.xlu0 %86, %v73
    %v88 = vpop.permute.xlu0 %87
    %91 = vset.pattern.permute.xlu0 0
    %92 = vperm.xlu0 %91, %v74
    %v93 = vpop.permute.xlu0 %92
    %v95 = vadd.f32 %v63, %v78
    %v96 = vadd.f32 %v64, %v78
    %v97 = vadd.f32 %v65, %v83
    %v98 = vadd.f32 %v66, %v83
    %v99 = vadd.f32 %v67, %v88
    %v100 = vadd.f32 %v68, %v88
    %v101 = vadd.f32 %v69, %v93
    %v102 = vadd.f32 %v70, %v93
    %v103 = vtanh.pop %v95
    %v104 = vtanh.pop %v96
    %v105 = vtanh.pop %v97
    %v106 = vtanh.pop %v98
    %v107 = vtanh.pop %v99
    %v108 = vtanh.pop %v100
    %v109 = vtanh.pop %v101
    %v110 = vtanh.pop %v102
    %v111 = vld [vmem:[%s2] sm:$0xff]
    %v112 = vld [vmem:[%s2 + $0x8] sm:$0xff]
    %v113 = vld [vmem:[%s2 + $0x10] sm:$0xff]
    %v114 = vld [vmem:[%s2 + $0x18] sm:$0xff]
    %v115 = vld [vmem:[%s5] sm:$0xff]
    %v116 = vld [vmem:[%s5 + $0x8] sm:$0xff]
    %v117 = vld [vmem:[%s5 + $0x10] sm:$0xff]
    %v118 = vld [vmem:[%s5 + $0x18] sm:$0xff]
    %120 = vset.pattern.permute.xlu0 0
    %121 = vperm.xlu0 %120, %v115
    %v122 = vpop.permute.xlu0 %121
    %125 = vset.pattern.permute.xlu0 0
    %126 = vperm.xlu0 %125, %v116
    %v127 = vpop.permute.xlu0 %126
    %130 = vset.pattern.permute.xlu0 0
    %131 = vperm.xlu0 %130, %v117
    %v132 = vpop.permute.xlu0 %131
    %135 = vset.pattern.permute.xlu0 0
    %136 = vperm.xlu0 %135, %v118
    %v137 = vpop.permute.xlu0 %136
    %vm139 = vcmask 261120
    %v141 = vsel %vm139, %v111, 0
    %v144 = vsel %vm139, %v112, 0
    %v147 = vsel %vm139, %v113, 0
    %v150 = vsel %vm139, %v114, 0
    %152 = vmatprep.subr.mxu0 %v104
    %153 = vmatpush1.msra.mxu0 %v103
    %154 = vmatprep.subr.mxu0 %v106
    %155 = vmatpush1.msra.mxu0 %v105
    %156 = vmatprep.subr.mxu0 %v108
    %157 = vmatpush1.msra.mxu0 %v107
    %158 = vmatprep.subr.mxu0 %v110
    %159 = vmatpush1.msra.mxu0 %v109
    %160 = vmatprep.subr.mxu0 0.0
    %161 = vmatpush1.msra.mxu0 0.0
    %162 = vmatprep.subr.mxu0 0.0
    %163 = vmatpush1.msra.mxu0 0.0
    %164 = vmatprep.subr.mxu0 0.0
    %165 = vmatpush1.msra.mxu0 0.0
    %166 = vmatprep.subr.mxu0 0.0
    %167 = vmatpush1.msra.mxu0 0.0
    %168 = vmatprep.subr.mxu0 0.0
    %169 = vmatpush1.msra.mxu0 0.0
    %170 = vmatprep.subr.mxu0 0.0
    %171 = vmatpush1.msra.mxu0 0.0
    %172 = vmatprep.subr.mxu0 0.0
    %173 = vmatpush1.msra.mxu0 0.0
    %174 = vmatprep.subr.mxu0 0.0
    %175 = vmatpush1.msra.mxu0 0.0
    %176 = vmatprep.subr.mxu0 0.0
    %177 = vmatpush1.msra.mxu0 0.0
    %178 = vmatprep.subr.mxu0 0.0
    %179 = vmatpush1.msra.mxu0 0.0
    %180 = vmatprep.subr.mxu0 0.0
    %181 = vmatpush1.msra.mxu0 0.0
    %182 = vmatprep.subr.mxu0 0.0
    %183 = vmatpush1.msra.mxu0 0.0
    %184 = vmatprep.subr.mxu0 0.0
    %185 = vmatpush1.msra.mxu0 0.0
    %186 = vmatprep.subr.mxu0 0.0
    %187 = vmatpush1.msra.mxu0 0.0
    %188 = vmatprep.subr.mxu0 0.0
    %189 = vmatpush1.msra.mxu0 0.0
    %190 = vmatprep.subr.mxu0 0.0
    %191 = vmatpush1.msra.mxu0 0.0
    %192 = vmatprep.subr.mxu0 0.0
    %193 = vmatpush1.msra.mxu0 0.0
    %194 = vmatprep.subr.mxu0 0.0
    %195 = vmatpush1.msra.mxu0 0.0
    %196 = vmatprep.subr.mxu0 0.0
    %197 = vmatpush1.msra.mxu0 0.0
    %198 = vmatprep.subr.mxu0 0.0
    %199 = vmatpush1.msra.mxu0 0.0
    %200 = vmatprep.subr.mxu0 0.0
    %201 = vmatpush1.msra.mxu0 0.0
    %202 = vmatprep.subr.mxu0 0.0
    %203 = vmatpush1.msra.mxu0 0.0
    %204 = vmatprep.subr.mxu0 0.0
    %205 = vmatpush1.msra.mxu0 0.0
    %206 = vmatprep.subr.mxu0 0.0
    %207 = vmatpush1.msra.mxu0 0.0
    %208 = vmatprep.subr.mxu0 0.0
    %209 = vmatpush1.msra.mxu0 0.0
    %210 = vmatprep.subr.mxu0 0.0
    %211 = vmatpush1.msra.mxu0 0.0
    %212 = vmatprep.subr.mxu0 0.0
    %213 = vmatpush1.msra.mxu0 0.0
    %214 = vmatprep.subr.mxu0 0.0
    %215 = vmatpush1.msra.mxu0 0.0
    %216 = vmatprep.mubr.f32.mxu0 0.0
    %217 = vmatmul.mubr.f32.gmra.mrb[0].mxu0 %v141
    %v218 = vpop.f32.mrb[0].mxu0
    %v219 = vadd.f32 %v122, %v218
    %v220 = vpop.f32.mrb[0].mxu0
    %v221 = vadd.f32 %v122, %v220
    %222 = vmatprep.mubr.f32.mxu0 0.0
    %223 = vmatmul.mubr.f32.gmra.mrb[0].mxu0 %v144
    %v224 = vpop.f32.mrb[0].mxu0
    %v225 = vadd.f32 %v127, %v224
    %v226 = vpop.f32.mrb[0].mxu0
    %v227 = vadd.f32 %v127, %v226
    %228 = vmatprep.mubr.f32.mxu0 0.0
    %229 = vmatmul.mubr.f32.gmra.mrb[0].mxu0 %v147
    %v230 = vpop.f32.mrb[0].mxu0
    %v231 = vadd.f32 %v132, %v230
    %v232 = vpop.f32.mrb[0].mxu0
    %v233 = vadd.f32 %v132, %v232
    %234 = vmatprep.mubr.f32.mxu0 0.0
    %235 = vmatmul.mubr.f32.gmra.mrb[0].mxu0 %v150
    %v236 = vpop.f32.mrb[0].mxu0
    %v237 = vadd.f32 %v137, %v236
    %v238 = vpop.f32.mrb[0].mxu0
    %v239 = vadd.f32 %v137, %v238
    %240 = vdwg.mxu0
    %v241 = vtanh.pop %v219
    %v242 = vtanh.pop %v221
    %v243 = vtanh.pop %v225
    %v244 = vtanh.pop %v227
    %v245 = vtanh.pop %v231
    %v246 = vtanh.pop %v233
    %v247 = vtanh.pop %v237
    %v248 = vtanh.pop %v239
    %v249 = vld [vmem:[%s3] sm:$0xff]
    %v250 = vld [vmem:[%s6] sm:$0xff]
    %252 = vset.pattern.permute.xlu0 0
    %253 = vperm.xlu0 %252, %v250
    %v254 = vpop.permute.xlu0 %253
    %v257 = vsel %vm139, %v249, 0
    %259 = vmatprep.subr.mxu0 %v242
    %260 = vmatpush1.msra.mxu0 %v241
    %261 = vmatprep.subr.mxu0 %v244
    %262 = vmatpush1.msra.mxu0 %v243
    %263 = vmatprep.subr.mxu0 %v246
    %264 = vmatpush1.msra.mxu0 %v245
    %265 = vmatprep.subr.mxu0 %v248
    %266 = vmatpush1.msra.mxu0 %v247
    %267 = vmatprep.subr.mxu0 0.0
    %268 = vmatpush1.msra.mxu0 0.0
    %269 = vmatprep.subr.mxu0 0.0
    %270 = vmatpush1.msra.mxu0 0.0
    %271 = vmatprep.subr.mxu0 0.0
    %272 = vmatpush1.msra.mxu0 0.0
    %273 = vmatprep.subr.mxu0 0.0
    %274 = vmatpush1.msra.mxu0 0.0
    %275 = vmatprep.subr.mxu0 0.0
    %276 = vmatpush1.msra.mxu0 0.0
    %277 = vmatprep.subr.mxu0 0.0
    %278 = vmatpush1.msra.mxu0 0.0
    %279 = vmatprep.subr.mxu0 0.0
    %280 = vmatpush1.msra.mxu0 0.0
    %281 = vmatprep.subr.mxu0 0.0
    %282 = vmatpush1.msra.mxu0 0.0
    %283 = vmatprep.subr.mxu0 0.0
    %284 = vmatpush1.msra.mxu0 0.0
    %285 = vmatprep.subr.mxu0 0.0
    %286 = vmatpush1.msra.mxu0 0.0
    %287 = vmatprep.subr.mxu0 0.0
    %288 = vmatpush1.msra.mxu0 0.0
    %289 = vmatprep.subr.mxu0 0.0
    %290 = vmatpush1.msra.mxu0 0.0
    %291 = vmatprep.subr.mxu0 0.0
    %292 = vmatpush1.msra.mxu0 0.0
    %293 = vmatprep.subr.mxu0 0.0
    %294 = vmatpush1.msra.mxu0 0.0
    %295 = vmatprep.subr.mxu0 0.0
    %296 = vmatpush1.msra.mxu0 0.0
    %297 = vmatprep.subr.mxu0 0.0
    %298 = vmatpush1.msra.mxu0 0.0
    %299 = vmatprep.subr.mxu0 0.0
    %300 = vmatpush1.msra.mxu0 0.0
    %301 = vmatprep.subr.mxu0 0.0
    %302 = vmatpush1.msra.mxu0 0.0
    %303 = vmatprep.subr.mxu0 0.0
    %304 = vmatpush1.msra.mxu0 0.0
    %305 = vmatprep.subr.mxu0 0.0
    %306 = vmatpush1.msra.mxu0 0.0
    %307 = vmatprep.subr.mxu0 0.0
    %308 = vmatpush1.msra.mxu0 0.0
    %309 = vmatprep.subr.mxu0 0.0
    %310 = vmatpush1.msra.mxu0 0.0
    %311 = vmatprep.subr.mxu0 0.0
    %312 = vmatpush1.msra.mxu0 0.0
    %313 = vmatprep.subr.mxu0 0.0
    %314 = vmatpush1.msra.mxu0 0.0
    %315 = vmatprep.subr.mxu0 0.0
    %316 = vmatpush1.msra.mxu0 0.0
    %317 = vmatprep.subr.mxu0 0.0
    %318 = vmatpush1.msra.mxu0 0.0
    %319 = vmatprep.subr.mxu0 0.0
    %320 = vmatpush1.msra.mxu0 0.0
    %321 = vmatprep.subr.mxu0 0.0
    %322 = vmatpush1.msra.mxu0 0.0
    %323 = vmatprep.mubr.f32.mxu0 0.0
    %324 = vmatmul.mubr.f32.gmra.mrb[0].mxu0 %v257
    %v325 = vpop.f32.mrb[0].mxu0
    %v326 = vadd.f32 %v254, %v325
    %v327 = vpop.f32.mrb[0].mxu0
    %v328 = vadd.f32 %v254, %v327
    %329 = vdwg.mxu0
    %330 = vst [vmem:[#allocation2] sm:$0xff] %v326
    %331 = vst [vmem:[#allocation2 + $0x8] sm:$0xff] %v328
    // Predicated region
    $region30: #{tpu_custom_call.1} parent=1 // pred_check
      _
    $region31: #{tpu_custom_call.1} parent=1 // pred_check_branch
      %333 = sbr.rel (0) target = $region33
    $region32: #{tpu_custom_call.1} parent=1 // pred_region
      %s335 = ssub.s32 256, 256
      %336 = vsyncadd [#allocation3], %s335
      %s338 = sshll.u32 [#allocation2], 4
      %s339 = int_to_ptr.vmem [resolvable:$true] %s338
      %341 = dma.vmem_to_hbm [thread:$0]  %s339, 256, %s7, [#allocation3]
    $region33: #{tpu_custom_call.1} parent=1 // pred_fallthru
      _
    // Predicated region
    $region34: #{tpu_custom_call.1} parent=1 // pred_check
      _
    $region35: #{tpu_custom_call.1} parent=1 // pred_check_branch
      %343 = sbr.rel (0) target = $region37
    $region36: #{tpu_custom_call.1} parent=1 // pred_region
      %344 = dma.done [#allocation3], 256
    $region37: #{tpu_custom_call.1} parent=1 // pred_fallthru
      _
    %345 = vsyncpa [#allocation3], 1

</llo_original>
